<compile_context>
chip_gen: v5e
topology: v5e:2x2
jax: 0.10.0
libtpu: 0.0.40
codegen_flags: <defaults>
</compile_context>

<pallas_src>
import functools

import jax
import jax.numpy as jnp
from jax.experimental import pallas as pl
from jax.experimental.pallas import tpu as pltpu


def _layernorm_kernel(x_ref, g_ref, b_ref, o_ref, *, eps):
    # Pass 1: row statistics in f32.  x32 only has to live until the two
    # reductions complete (nothing full-tile persists across the barrier).
    x32 = x_ref[...].astype(jnp.float32)                         # (tile, n_state)
    mean = jnp.mean(x32, axis=-1, keepdims=True)
    mean_sq = jnp.mean(x32 * x32, axis=-1, keepdims=True)
    var = jnp.maximum(mean_sq - mean * mean, 0.0)                # near-constant rows
    inv = jax.lax.rsqrt(var + eps)                               # eps inside the sqrt

    # Pass 2: re-read x, normalize, fuse scale/shift into the store.
    g = g_ref[...].astype(jnp.float32)
    b = b_ref[...].astype(jnp.float32)
    o_ref[...] = (((x_ref[...].astype(jnp.float32) - mean) * inv) * g
                  + b).astype(o_ref.dtype)


def _round_up(v, m):
    return -(-v // m) * m


def _sublane_multiple(dtype):
    """Row-tile alignment for the dtype's sublane packing (8/16/32)."""
    return {4: 8, 2: 16, 1: 32}.get(jnp.dtype(dtype).itemsize, 8)


def _vmem_budgets():
    """Return (tile_budget_bytes, vmem_limit_cap_bytes), generation aware."""
    cap = 0
    try:
        cap = int(getattr(pltpu.get_tpu_info(), "vmem_capacity_bytes", 0) or 0)
    except Exception:
        cap = 0
    if cap >= (96 << 20):
        # v5e / v6e: 128 MiB physical VMEM per TensorCore -> spend it.
        return (56 << 20), (96 << 20)
    # v7x (64 MiB physical per TC) or unknown: keep headroom for the second
    # copies of double-buffered blocks, g/b, and Mosaic internal scratch.
    return (26 << 20), (48 << 20)


def _pick_row_tile(rows, n_state, in_itemsize, out_itemsize, sublane,
                   vmem_budget_bytes):
    """Largest sublane-aligned row tile whose VMEM working set fits the budget.

    Working set per row = double-buffered input + output blocks plus ~1
    full-tile f32 temporary (the lean two-read kernel body needs no more).
    """
    bytes_per_row = n_state * (2 * in_itemsize + 2 * out_itemsize + 4)
    tile = vmem_budget_bytes // max(bytes_per_row, 1)
    rows_rounded = _round_up(rows, sublane)
    tile = min(tile, rows_rounded)

    # For large problems keep the grid to >= ~8 steps so v7x can shard the row
    # grid across both TensorCores and the pipeline stays full -- but never
    # shrink below ~1 MiB of input per block (per-step overhead ~0.35 us).
    min_steps = 8
    step_cap = _round_up(pl.cdiv(rows, min_steps), sublane)
    min_block_rows = _round_up(pl.cdiv(1 << 20, max(n_state * in_itemsize, 1)),
                               sublane)
    if step_cap >= min_block_rows:
        tile = min(tile, step_cap)

    tile = (tile // sublane) * sublane
    return max(tile, sublane)


def layer_norm(x, g, b, eps=1e-5, row_tile=None):
    """x: [..., n_state]; g, b: [n_state]. Returns same shape/dtype as x.

    Lane-efficient when n_state is a multiple of 128; smaller n_state is
    correct but under-utilizes vreg lanes.
    """
    # TODO(synk): for n_state < 128, a lane-packing layout (multiple rows per
    # lane group + segmented reduction) would recover lane utilization.
    orig_shape = x.shape
    n_state = orig_shape[-1]
    rows = 1
    for d in orig_shape[:-1]:
        rows *= d
    x2 = x.reshape(rows, n_state)
    g2 = g.reshape(1, n_state)
    b2 = b.reshape(1, n_state)

    in_itemsize = jnp.dtype(x.dtype).itemsize
    out_itemsize = in_itemsize
    sublane = _sublane_multiple(x.dtype)
    tile_budget, limit_cap = _vmem_budgets()

    if row_tile is None:
        tile = _pick_row_tile(rows, n_state, in_itemsize, out_itemsize,
                              sublane, tile_budget)
    else:
        tile = max(sublane,
                   (min(row_tile, _round_up(rows, sublane)) // sublane) * sublane)

    grid = (pl.cdiv(rows, tile),)

    # Scoped VMEM request: double-buffered in/out blocks + one f32 temp + g/b,
    # with headroom, capped generation-aware (well below 64 MiB on v7x).
    working_set = tile * n_state * (2 * in_itemsize + 2 * out_itemsize + 4) \
        + 2 * n_state * 4
    vmem_limit = int(min(limit_cap, max(32 << 20, working_set + (8 << 20))))

    kernel = functools.partial(_layernorm_kernel, eps=eps)

    out = pl.pallas_call(
        kernel,
        out_shape=jax.ShapeDtypeStruct((rows, n_state), x.dtype),
        grid_spec=pl.GridSpec(
            grid=grid,
            in_specs=[
                pl.BlockSpec((tile, n_state), lambda i: (i, 0)),
                pl.BlockSpec((1, n_state), lambda i: (0, 0)),
                pl.BlockSpec((1, n_state), lambda i: (0, 0)),
            ],
            out_specs=pl.BlockSpec((tile, n_state), lambda i: (i, 0)),
        ),
        compiler_params=pltpu.CompilerParams(
            dimension_semantics=("parallel",),
            vmem_limit_bytes=vmem_limit,
        ),
    )(x2, g2, b2)
    return out.reshape(orig_shape)


if __name__ == "__main__":
    n_state = 32
    batch, seq = 2, 8

    key = jax.random.PRNGKey(0)
    x = jax.random.normal(key, (batch, seq, n_state), dtype=jnp.float32)

    # Deterministic parameter init, matching nn.Parameter(ones) / nn.Parameter(zeros).
    g = jnp.ones((n_state,), dtype=jnp.float32)
    b = jnp.zeros((n_state,), dtype=jnp.float32)

    y = layer_norm(x, g, b, eps=1e-5)
    y = jax.block_until_ready(y)

    # Pure-JAX reference check (same math as the PyTorch module).
    u = jnp.mean(x, axis=-1, keepdims=True)
    s = jnp.mean((x - u) ** 2, axis=-1, keepdims=True)
    ref = g * ((x - u) / jnp.sqrt(s + 1e-5)) + b
    assert jnp.allclose(y, ref, atol=1e-5, rtol=1e-5), "mismatch vs reference"

    print("KERNEL_OK")
</pallas_src>

<mosaic_0001>
module attributes {stable_mosaic.version = 11 : i64} {
  func.func @_layernorm_kernel(%arg0: i32, %arg1: memref<16x32xf32, #tpu.memory_space<vmem>>, %arg2: memref<1x32xf32, #tpu.memory_space<vmem>>, %arg3: memref<1x32xf32, #tpu.memory_space<vmem>>, %arg4: memref<16x32xf32, #tpu.memory_space<vmem>>) attributes {dimension_semantics = [#tpu.dimension_semantics<parallel>], iteration_bounds = array<i64: 1>, scalar_prefetch = 0 : i64, scratch_operands = 0 : i64, tpu.core_type = #tpu.core_type<tc>, window_params = [{transform_indices = @transform_0, window_bounds = array<i64: 16, 32>}, {pipeline_mode = #tpu.pipeline_mode<synchronous>, transform_indices = @transform_1, window_bounds = array<i64: 1, 32>}, {pipeline_mode = #tpu.pipeline_mode<synchronous>, transform_indices = @transform_2, window_bounds = array<i64: 1, 32>}, {transform_indices = @transform_3, window_bounds = array<i64: 16, 32>}]} {
    %c0 = arith.constant 0 : index
    %c0_0 = arith.constant 0 : index
    %0 = vector.load %arg1[%c0, %c0_0] : memref<16x32xf32, #tpu.memory_space<vmem>>, vector<16x32xf32>
    %cst = arith.constant dense<0.000000e+00> : vector<16xf32>
    %1 = vector.multi_reduction <add>, %0, %cst [1] : vector<16x32xf32> to vector<16xf32>
    %2 = vector.shape_cast %1 : vector<16xf32> to vector<16x1xf32>
    %cst_1 = arith.constant 3.200000e+01 : f32
    %3 = vector.broadcast %cst_1 : f32 to vector<16x1xf32>
    %4 = arith.divf %2, %3 : vector<16x1xf32>
    %5 = arith.mulf %0, %0 : vector<16x32xf32>
    %cst_2 = arith.constant dense<0.000000e+00> : vector<16xf32>
    %6 = vector.multi_reduction <add>, %5, %cst_2 [1] : vector<16x32xf32> to vector<16xf32>
    %7 = vector.shape_cast %6 : vector<16xf32> to vector<16x1xf32>
    %cst_3 = arith.constant 3.200000e+01 : f32
    %8 = vector.broadcast %cst_3 : f32 to vector<16x1xf32>
    %9 = arith.divf %7, %8 : vector<16x1xf32>
    %10 = arith.mulf %4, %4 : vector<16x1xf32>
    %11 = arith.subf %9, %10 : vector<16x1xf32>
    %cst_4 = arith.constant 0.000000e+00 : f32
    %12 = vector.broadcast %cst_4 : f32 to vector<16x1xf32>
    %13 = arith.maximumf %11, %12 : vector<16x1xf32>
    %cst_5 = arith.constant 9.99999974E-6 : f32
    %14 = vector.broadcast %cst_5 : f32 to vector<16x1xf32>
    %15 = arith.addf %13, %14 : vector<16x1xf32>
    %16 = math.rsqrt %15 : vector<16x1xf32>
    %c0_6 = arith.constant 0 : index
    %c0_7 = arith.constant 0 : index
    %17 = vector.load %arg2[%c0_6, %c0_7] : memref<1x32xf32, #tpu.memory_space<vmem>>, vector<1x32xf32>
    %c0_8 = arith.constant 0 : index
    %c0_9 = arith.constant 0 : index
    %18 = vector.load %arg3[%c0_8, %c0_9] : memref<1x32xf32, #tpu.memory_space<vmem>>, vector<1x32xf32>
    %c0_10 = arith.constant 0 : index
    %c0_11 = arith.constant 0 : index
    %19 = vector.load %arg1[%c0_10, %c0_11] : memref<16x32xf32, #tpu.memory_space<vmem>>, vector<16x32xf32>
    %20 = vector.broadcast %4 : vector<16x1xf32> to vector<16x32xf32>
    %21 = arith.subf %19, %20 : vector<16x32xf32>
    %22 = vector.broadcast %16 : vector<16x1xf32> to vector<16x32xf32>
    %23 = arith.mulf %21, %22 : vector<16x32xf32>
    %24 = vector.broadcast %17 : vector<1x32xf32> to vector<16x32xf32>
    %25 = arith.mulf %23, %24 : vector<16x32xf32>
    %26 = vector.broadcast %18 : vector<1x32xf32> to vector<16x32xf32>
    %27 = arith.addf %25, %26 : vector<16x32xf32>
    %c0_12 = arith.constant 0 : index
    %c0_13 = arith.constant 0 : index
    %28 = vector.load %arg4[%c0_12, %c0_13] : memref<16x32xf32, #tpu.memory_space<vmem>>, vector<16x32xf32>
    tpu.vector_store %arg4[%c0_12, %c0_13], %27 {strides = array<i32>} : memref<16x32xf32, #tpu.memory_space<vmem>>, vector<16x32xf32>,
    return
  }
  func.func @transform_0(%arg0: i32) -> (i32, i32) {
    %c0_i32 = arith.constant 0 : i32
    %c0_i32_0 = arith.constant 0 : i32
    return %arg0, %c0_i32 : i32, i32
  }
  func.func @transform_1(%arg0: i32) -> (i32, i32) {
    %c0_i32 = arith.constant 0 : i32
    %c0_i32_0 = arith.constant 0 : i32
    %c0_i32_1 = arith.constant 0 : i32
    return %c0_i32, %c0_i32_0 : i32, i32
  }
  func.func @transform_2(%arg0: i32) -> (i32, i32) {
    %c0_i32 = arith.constant 0 : i32
    %c0_i32_0 = arith.constant 0 : i32
    %c0_i32_1 = arith.constant 0 : i32
    return %c0_i32, %c0_i32_0 : i32, i32
  }
  func.func @transform_3(%arg0: i32) -> (i32, i32) {
    %c0_i32 = arith.constant 0 : i32
    %c0_i32_0 = arith.constant 0 : i32
    return %arg0, %c0_i32 : i32, i32
  }
}

</mosaic_0001>

<llo_original>
// kernel: tpu_custom_call.1
$region0: #{tpu_custom_call.1}
  #allocation0 [shape = 'u32[]', space=smem, size = 0x4, offset = 0x4, fixed_abs, tag = 'smem constant byte address 0x4 - core index']
  #allocation1 [shape = 'u32[72,128]{1,0:T(1,128)}', space=vmem, size = 0x9000, scoped, tag = 'internal scratch']
  %s0 = inlined_call_operand.hbm [shape: f32[16,32], index: 0, kind: input, shape index: {}]
  %s1 = inlined_call_operand.hbm [shape: f32[1,32], index: 1, kind: input, shape index: {}]
  %s2 = inlined_call_operand.vmem [shape: f32[1,32], index: 2, kind: input, shape index: {}]
  %s3 = inlined_call_operand.hbm [shape: f32[16,32], index: 3, kind: output, shape index: {}]
  %s4 = sld [smem:[#allocation0]]
  $region30: #{tpu_custom_call.1} parent=0
    _
  %s6 = ssub.s32 1, %s4
  %s7 = scalar_select 0, %s6, %s4
  $region1: #{tpu_custom_call.1} parent=0
    #allocation2 [shape = 'u8[8192]{0}', space=vmem, size = 0x2000, scoped, tag = 'input window, operand 0, single buffered']
    #allocation3 [shape = 's32[1]{0}', space=sflag, size = 0x4, scoped, tag = 'scoped memory for tpu_custom_call.1']
    #allocation4 [shape = 's32[1]{0}', space=sflag, size = 0x4, scoped, tag = 'scoped memory for tpu_custom_call.1']
    #allocation5 [shape = 'u8[512]{0}', space=vmem, size = 0x400, scoped, tag = 'input window, operand 1, single buffered']
    #allocation6 [shape = 's32[1]{0}', space=sflag, size = 0x4, scoped, tag = 'scoped memory for tpu_custom_call.1']
    #allocation7 [shape = 'u8[8192]{0}', space=vmem, size = 0x2000, scoped, tag = 'output window, operand 0, single buffered']
    %8 = vsyncpa [#allocation3], 0
    %9 = vsyncpa [#allocation6], 0
    %10 = vsyncpa [#allocation4], 0
    // Predicated region
    $region2: #{tpu_custom_call.1} parent=1 // pred_check
      _
    $region3: #{tpu_custom_call.1} parent=1 // pred_check_branch
      %12 = sbr.rel (0) target = $region5
    $region4: #{tpu_custom_call.1} parent=1 // pred_region
      %14 = vsyncadd [#allocation3], 0
      %s15 = sshll.u32 %s0, 4
      %s16 = int_to_ptr.hbm [resolvable:$true] %s15
      %s17 = sshll.u32 [#allocation2], 4
      %s18 = int_to_ptr.vmem [resolvable:$true] %s17
      %23 = dma.hbm_to_vmem [thread:$0]  %s16, 256, %s18, [#allocation3], 128, 128, 8
    $region5: #{tpu_custom_call.1} parent=1 // pred_fallthru
      _
    // Predicated region
    $region6: #{tpu_custom_call.1} parent=1 // pred_check
      _
    $region7: #{tpu_custom_call.1} parent=1 // pred_check_branch
      %25 = sbr.rel (0) target = $region9
    $region8: #{tpu_custom_call.1} parent=1 // pred_region
      %27 = vsyncadd [#allocation6], 0
      %s29 = sshll.u32 %s1, 4
      %s30 = int_to_ptr.hbm [resolvable:$true] %s29
      %s31 = sshll.u32 [#allocation5], 4
      %s32 = int_to_ptr.vmem [resolvable:$true] %s31
      %34 = dma.hbm_to_vmem [thread:$0]  %s30, 16, %s32, [#allocation6]
    $region9: #{tpu_custom_call.1} parent=1 // pred_fallthru
      _
    // Predicated region
    $region10: #{tpu_custom_call.1} parent=1 // pred_check
      _
    $region11: #{tpu_custom_call.1} parent=1 // pred_check_branch
      %36 = sbr.rel (0) target = $region13
    $region12: #{tpu_custom_call.1} parent=1 // pred_region
      _
    $region13: #{tpu_custom_call.1} parent=1 // pred_fallthru
      _
    // Predicated region
    $region14: #{tpu_custom_call.1} parent=1 // pred_check
      _
    $region15: #{tpu_custom_call.1} parent=1 // pred_check_branch
      %38 = sbr.rel (0) target = $region17
    $region16: #{tpu_custom_call.1} parent=1 // pred_region
      %40 = dma.done [#allocation3], 256
    $region17: #{tpu_custom_call.1} parent=1 // pred_fallthru
      _
    // Predicated region
    $region18: #{tpu_custom_call.1} parent=1 // pred_check
      _
    $region19: #{tpu_custom_call.1} parent=1 // pred_check_branch
      %42 = sbr.rel (0) target = $region21
    $region20: #{tpu_custom_call.1} parent=1 // pred_region
      %44 = dma.done [#allocation6], 16
    $region21: #{tpu_custom_call.1} parent=1 // pred_fallthru
      _
    %v45 = vld [vmem:[#allocation2] sm:$0xff]
    %v46 = vld [vmem:[#allocation2 + $0x8] sm:$0xff]
    %vm47 = vcmask 261120
    %v48 = vsel %vm47, %v45, 0.0
    %49 = vadd.xlane.f32.xlu0 %v48
    %v50 = vpop.xlane.xlu0 %49
    %v51 = vsel %vm47, %v46, 0.0
    %52 = vadd.xlane.f32.xlu0 %v51
    %v53 = vpop.xlane.xlu0 %52
    %v54 = vrcp.pop 32.0
    %v55 = vmul.f32 32.0, %v54
    %v56 = vsub.f32 1.0, %v55
    %v57 = vmul.f32 %v54, %v56
    %v58 = vadd.f32 %v54, %v57
    %vm59 = vweird.f32 %v54
    %v60 = vsel %vm59, %v54, %v58
    %v61 = vmul.f32 %v50, %v60
    %v62 = vmul.f32 %v53, %v60
    %v63 = vmul.f32 %v45, %v45
    %v64 = vmul.f32 %v46, %v46
    %v65 = vsel %vm47, %v63, 0.0
    %66 = vadd.xlane.f32.xlu0 %v65
    %v67 = vpop.xlane.xlu0 %66
    %v68 = vsel %vm47, %v64, 0.0
    %69 = vadd.xlane.f32.xlu0 %v68
    %v70 = vpop.xlane.xlu0 %69
    %v71 = vmul.f32 %v67, %v60
    %v72 = vmul.f32 %v70, %v60
    %v73 = vmul.f32 %v61, %v61
    %v74 = vmul.f32 %v62, %v62
    %v75 = vsub.f32 %v71, %v73
    %v76 = vsub.f32 %v72, %v74
    %v77 = vmax.f32 %v75, 0.0
    %v78 = vmax.f32 %v76, 0.0
    %v79 = vadd.f32 %v77, 1e-05
    %v80 = vadd.f32 %v78, 1e-05
    %v81 = vrsqrt.pop %v79
    %v82 = vmul.f32 %v81, %v79
    %v83 = vmul.f32 %v82, %v81
    %v84 = vmul.f32 0.5, %v83
    %v85 = vsub.f32 1.5, %v84
    %v86 = vmul.f32 %v81, %v85
    %vm87 = vweird.f32 %v79
    %vm88 = vweird.f32 %v81
    %vm89 = vmor %vm87, %vm88
    %v90 = vsel %vm89, %v81, %v86
    %v91 = vrsqrt.pop %v80
    %v92 = vmul.f32 %v91, %v80
    %v93 = vmul.f32 %v92, %v91
    %v94 = vmul.f32 0.5, %v93
    %v95 = vsub.f32 1.5, %v94
    %v96 = vmul.f32 %v91, %v95
    %vm97 = vweird.f32 %v80
    %vm98 = vweird.f32 %v91
    %vm99 = vmor %vm97, %vm98
    %v100 = vsel %vm99, %v91, %v96
    %v101 = vld [vmem:[#allocation5] sm:$0x1]
    %v102 = vld [vmem:[%s2] sm:$0x1]
    %v103 = vsub.f32 %v45, %v61
    %v104 = vsub.f32 %v46, %v62
    %v105 = vmul.f32 %v103, %v90
    %v106 = vmul.f32 %v104, %v100
    %v108 = vperm.slane %v101, 0
    %v110 = vmul.f32 %v105, %v108
    %v111 = vmul.f32 %v106, %v108
    %v113 = vperm.slane %v102, 0
    %v115 = vadd.f32 %v110, %v113
    %v116 = vadd.f32 %v111, %v113
    %117 = vst.msk [vmem:[#allocation7] sm:$0xff] %vm47, %v115
    %118 = vst.msk [vmem:[#allocation7 + $0x8] sm:$0xff] %vm47, %v116
    // Predicated region
    $region22: #{tpu_custom_call.1} parent=1 // pred_check
      _
    $region23: #{tpu_custom_call.1} parent=1 // pred_check_branch
      %120 = sbr.rel (0) target = $region25
    $region24: #{tpu_custom_call.1} parent=1 // pred_region
      %122 = vsyncadd [#allocation4], 0
      %s123 = sshll.u32 [#allocation7], 4
      %s124 = int_to_ptr.vmem [resolvable:$true] %s123
      %s125 = sshll.u32 %s3, 4
      %s126 = int_to_ptr.hbm [resolvable:$true] %s125
      %131 = dma.vmem_to_hbm [thread:$0]  %s124, 256, %s126, [#allocation4], 128, 128, 8
    $region25: #{tpu_custom_call.1} parent=1 // pred_fallthru
      _
    // Predicated region
    $region26: #{tpu_custom_call.1} parent=1 // pred_check
      _
    $region27: #{tpu_custom_call.1} parent=1 // pred_check_branch
      %133 = sbr.rel (0) target = $region29
    $region28: #{tpu_custom_call.1} parent=1 // pred_region
      %135 = dma.done [#allocation4], 256
    $region29: #{tpu_custom_call.1} parent=1 // pred_fallthru
      _
    %136 = vsyncpa [#allocation3], 1
    %137 = vsyncpa [#allocation6], 1
    %138 = vsyncpa [#allocation4], 1

</llo_original>
